<compile_context>
chip_gen: v6e
topology: v6e:2x2x1
jax: 0.10.0
libtpu: 0.0.40
codegen_flags: <defaults>
</compile_context>

<pallas_src>
import functools
import math

import numpy as np
import jax
import jax.numpy as jnp
from jax.experimental import pallas as pl
from jax.experimental.pallas import tpu as pltpu


def _deconv1d_kernel(x_ref, w_ref, b_ref, o_ref, *, Bt, Lin, Lq, D, W):
    """One batch tile (Bt elements) per grid step.

    x_ref: (Bt*Lin, Cin)   bf16 input rows (length-major, channels on lanes)
    w_ref: (Cin, D*W)      bf16 weight; tap groups d on the lane axis, each
                           group phase-interleaved: column d*W + r*Cout_p + c
    b_ref: (1, 1, W)       f32 bias, replicated once per phase (pad chans = 0)
    o_ref: (Bt, Lq, W)     f32 phase-interleaved (uncropped) output
    """
    # Single fused MXU matmul: all batch rows x all (tap group, phase, channel).
    y = jnp.dot(x_ref[...], w_ref[...],
                preferred_element_type=jnp.float32)          # (Bt*Lin, D*W) f32
    y = y.reshape(Bt, Lin, D * W)                             # free major-dim split

    # ceil(K/stride) full-lane-width adds; tap group d lands at rows [d, d+Lin).
    # Shift by zero-padding (value accumulation) instead of a sublane-unaligned
    # RMW on o_ref, so the output block is written exactly once below.
    acc = None
    for d in range(D):
        slab = y[:, :, d * W:(d + 1) * W]                     # (Bt, Lin, W), 128-aligned
        slab = jnp.pad(slab, ((0, 0), (d, Lq - Lin - d), (0, 0)))
        acc = slab if acc is None else acc + slab

    # Fused bias + ReLU; one lane-dense store (W is a multiple of 128).
    o_ref[...] = jnp.maximum(acc + b_ref[...], 0.0)


def _vmem_budget():
    """Generation-aware per-step tile budget and scoped-VMEM limit."""
    try:
        cap = int(pltpu.get_tpu_info().vmem_capacity_bytes)
    except Exception:                                   # pragma: no cover
        cap = 64 * 1024 * 1024                          # conservative (v7x-sized)
    budget = max(4 * 1024 * 1024, cap // 5)             # ~25 MiB v5e/v6e, ~12.8 MiB v7x
    vmem_limit = min(cap * 3 // 4, 64 * 1024 * 1024)    # 64 MiB v5e/v6e, 48 MiB v7x
    return budget, vmem_limit


def _pick_bt(B, Lin, per_b_bytes, fixed_bytes, budget):
    """Batch-tile size: fill the MXU M dim within the VMEM budget, keep the
    x block legal ((Bt*Lin) % 8 == 0 unless full), keep >= 2 grid steps."""
    divisors = [d for d in range(1, B + 1) if B % d == 0]
    legal = [d for d in divisors if d == B or (d * Lin) % 8 == 0]
    if B >= 2:
        capped = [d for d in legal if d <= B // 2]       # both v7x TCs get work
        if capped:
            legal = capped
    fitting = [d for d in legal if d * per_b_bytes + fixed_bytes <= budget]
    cands = fitting if fitting else [min(legal)]
    # Prefer MXU-friendly M = Bt*Lin (multiple of 256), then the largest tile.
    return max(cands, key=lambda d: (int((d * Lin) % 256 == 0), d))


def deconv1d_pallas(x_ncw, weight, bias, *, stride, out_length):
    """Matches bert/train/sigunet/models.py::deconv1d.forward (act = ReLU).

    x_ncw : (B, C_in, L_in)   float32
    weight: (C_in, C_out, K)  float32   (ConvTranspose1d weight layout)
    bias  : (C_out,)          float32
    returns (B, C_out, out_length) float32
    """
    B, Cin, Lin = x_ncw.shape
    Cin_w, Cout, K = weight.shape
    assert Cin_w == Cin

    # Exactly mirror the PyTorch module's padding arithmetic
    # (note: `&` binds looser than +/- in its expression, i.e. total & 1).
    assert (Lin - 1) * stride + K > out_length
    total = (Lin - 1) * stride + K - out_length
    output_padding = total & 1
    padding = (total + output_padding) // 2
    # output_padding is folded into the asymmetric crop below.

    D = -(-K // stride)                     # number of tap groups (ceil)
    Kp = D * stride                         # K padded with zero taps
    Lq = Lin + D - 1                        # phase rows; Lq*stride >= (Lin-1)*stride+K

    # Lane-dense output: pad Cout so W = stride*Cout_p is a multiple of 128
    # -> every store is an unmasked full-lane vst; crop padded channels later.
    unit = 128 // math.gcd(stride, 128)
    Cout_p = -(-Cout // unit) * unit
    W = stride * Cout_p

    # Batch tile selection (hardware-derived budget; double-buffered in/out).
    budget, vmem_limit = _vmem_budget()
    per_b = 2 * (Lin * Cin * 2 + Lq * W * 4)
    fixed = 2 * (Cin * D * W * 2 + W * 4)
    Bt = _pick_bt(B, Lin, per_b, fixed, budget)

    # Layout plumbing (bf16 MXU operands, f32 accumulation). Cast before the
    # transpose so the relayout moves half the bytes.
    x2d = jnp.transpose(x_ncw.astype(jnp.bfloat16), (0, 2, 1)).reshape(B * Lin, Cin)
    # Weight -> (Cin, K, Cout) -> pad to (Cin, Kp, Cout_p) -> group taps by
    # shift d with phases r interleaved on the lane axis: (Cin, D*W).
    w_kc = jnp.transpose(weight, (0, 2, 1))
    w_kc = jnp.pad(w_kc, ((0, 0), (0, Kp - K), (0, Cout_p - Cout)))
    w2d = w_kc.reshape(Cin, D * W).astype(jnp.bfloat16)
    bias_ph = jnp.tile(jnp.pad(bias.astype(jnp.float32), (0, Cout_p - Cout)), stride)
    bias_ph = bias_ph.reshape(1, 1, W)

    kernel = functools.partial(_deconv1d_kernel, Bt=Bt, Lin=Lin, Lq=Lq, D=D, W=W)

    out_ph = pl.pallas_call(
        kernel,
        out_shape=jax.ShapeDtypeStruct((B, Lq, W), jnp.float32),
        grid_spec=pltpu.PrefetchScalarGridSpec(
            num_scalar_prefetch=0,
            grid=(B // Bt,),
            in_specs=[
                pl.BlockSpec((Bt * Lin, Cin), lambda g: (g, 0)),
                pl.BlockSpec((Cin, D * W), lambda g: (0, 0)),
                pl.BlockSpec((1, 1, W), lambda g: (0, 0, 0)),
            ],
            out_specs=pl.BlockSpec((Bt, Lq, W), lambda g: (g, 0, 0)),
        ),
        compiler_params=pltpu.CompilerParams(
            dimension_semantics=("parallel",),       # batch tiles independent
            vmem_limit_bytes=int(vmem_limit),
        ),
    )(x2d, w2d, bias_ph)

    # De-interleave phases (free reshape), crop by `padding`, drop padded
    # channels, return NCW.  These fuse into one XLA copy under jit.
    out_full = out_ph.reshape(B, Lq * stride, Cout_p)
    out_nlc = out_full[:, padding:padding + out_length, :Cout]
    return jnp.transpose(out_nlc, (0, 2, 1))


def deconv1d_reference(x_ncw, weight, bias, *, stride, out_length):
    """Pure-JAX reference of PyTorch ConvTranspose1d(+ReLU) with the same
    padding/output_padding arithmetic.  Inputs are rounded to bf16 to mirror
    the kernel's bf16 MXU operands (accumulation stays f32 in both paths)."""
    B, Cin, Lin = x_ncw.shape
    _, Cout, K = weight.shape
    total = (Lin - 1) * stride + K - out_length
    output_padding = total & 1
    padding = (total + output_padding) // 2
    Lfull = (Lin - 1) * stride + K

    xq = x_ncw.astype(jnp.bfloat16).astype(jnp.float32)
    wq = weight.astype(jnp.bfloat16).astype(jnp.float32)

    full = jnp.zeros((B, Cout, Lfull), jnp.float32)
    for i in range(Lin):
        for k in range(K):
            contrib = jnp.einsum('bc,cd->bd', xq[:, :, i], wq[:, :, k])
            full = full.at[:, :, i * stride + k].add(contrib)
    out = full[:, :, padding:padding + out_length] + bias[None, :, None]
    return jnp.maximum(out, 0.0)


if __name__ == "__main__":
    # Small shapes consistent with the module: (batch, in_channels, length).
    B, Cin, Cout = 2, 4, 6
    Lin, K, stride = 8, 5, 2
    out_length = 16          # (Lin-1)*stride + K = 19 > 16  -> module assert holds

    key = jax.random.PRNGKey(0)
    kx, kw, kb = jax.random.split(key, 3)
    x = jax.random.normal(kx, (B, Cin, Lin), dtype=jnp.float32)
    # Deterministic synthetic parameters (ConvTranspose1d weight: (Cin, Cout, K)).
    weight = 0.2 * jax.random.normal(kw, (Cin, Cout, K), dtype=jnp.float32)
    bias = 0.1 * jax.random.normal(kb, (Cout,), dtype=jnp.float32)

    # jit the wrapper so the layout plumbing (cast/transpose/crop) fuses into a
    # minimal number of HBM passes around the pallas_call.
    fn = jax.jit(functools.partial(deconv1d_pallas, stride=stride,
                                   out_length=out_length))
    out = jax.block_until_ready(fn(x, weight, bias))

    ref = jax.block_until_ready(
        deconv1d_reference(x, weight, bias, stride=stride, out_length=out_length))

    assert out.shape == (B, Cout, out_length), out.shape
    np.testing.assert_allclose(np.asarray(out), np.asarray(ref),
                               rtol=1e-4, atol=1e-4)
    print("KERNEL_OK")
</pallas_src>

<mosaic_0001>
module attributes {stable_mosaic.version = 11 : i64} {
  func.func @_deconv1d_kernel(%arg0: i32, %arg1: memref<8x4xbf16, #tpu.memory_space<vmem>>, %arg2: memref<4x384xbf16, #tpu.memory_space<vmem>>, %arg3: memref<1x1x128xf32, #tpu.memory_space<vmem>>, %arg4: memref<1x10x128xf32, #tpu.memory_space<vmem>>) attributes {dimension_semantics = [#tpu.dimension_semantics<parallel>], iteration_bounds = array<i64: 2>, scalar_prefetch = 0 : i64, scratch_operands = 0 : i64, tpu.core_type = #tpu.core_type<tc>, window_params = [{transform_indices = @transform_0, window_bounds = array<i64: 8, 4>}, {pipeline_mode = #tpu.pipeline_mode<synchronous>, transform_indices = @transform_1, window_bounds = array<i64: 4, 384>}, {pipeline_mode = #tpu.pipeline_mode<synchronous>, transform_indices = @transform_2, window_bounds = array<i64: 1, 1, 128>}, {transform_indices = @transform_3, window_bounds = array<i64: 1, 10, 128>}]} {
    %c0 = arith.constant 0 : index
    %c0_0 = arith.constant 0 : index
    %0 = vector.load %arg1[%c0, %c0_0] : memref<8x4xbf16, #tpu.memory_space<vmem>>, vector<8x4xbf16>
    %c0_1 = arith.constant 0 : index
    %c0_2 = arith.constant 0 : index
    %1 = vector.load %arg2[%c0_1, %c0_2] : memref<4x384xbf16, #tpu.memory_space<vmem>>, vector<4x384xbf16>
    %cst = arith.constant dense<0.000000e+00> : vector<8x384xf32>
    %2 = tpu.matmul %0, %1, %cst {dimension_numbers = #tpu.dot_dimension_numbers<[1], [0], [0], [1], [0, 0, 1, 1], [], []>} : vector<8x4xbf16>, vector<4x384xbf16>, vector<8x384xf32> -> vector<8x384xf32>
    %3 = vector.shape_cast %2 : vector<8x384xf32> to vector<1x8x384xf32>
    %4 = vector.extract_strided_slice %3 {offsets = [0, 0, 0], sizes = [1, 8, 128], strides = [1, 1, 1]} : vector<1x8x384xf32> to vector<1x8x128xf32>
    %c0_i32 = arith.constant 0 : i32
    %5 = arith.sitofp %c0_i32 : i32 to f32
    %6 = vector.broadcast %5 : f32 to vector<1x2x128xf32>
    %7 = tpu.concatenate %4, %6 in 1 : vector<1x8x128xf32>, vector<1x2x128xf32> -> vector<1x10x128xf32>
    %8 = vector.extract_strided_slice %3 {offsets = [0, 0, 128], sizes = [1, 8, 128], strides = [1, 1, 1]} : vector<1x8x384xf32> to vector<1x8x128xf32>
    %c0_i32_3 = arith.constant 0 : i32
    %9 = arith.sitofp %c0_i32_3 : i32 to f32
    %10 = vector.broadcast %9 : f32 to vector<1x1x128xf32>
    %11 = tpu.concatenate %10, %8 in 1 : vector<1x1x128xf32>, vector<1x8x128xf32> -> vector<1x9x128xf32>
    %12 = vector.broadcast %9 : f32 to vector<1x1x128xf32>
    %13 = tpu.concatenate %11, %12 in 1 : vector<1x9x128xf32>, vector<1x1x128xf32> -> vector<1x10x128xf32>
    %14 = arith.addf %7, %13 : vector<1x10x128xf32>
    %15 = vector.extract_strided_slice %3 {offsets = [0, 0, 256], sizes = [1, 8, 128], strides = [1, 1, 1]} : vector<1x8x384xf32> to vector<1x8x128xf32>
    %c0_i32_4 = arith.constant 0 : i32
    %16 = arith.sitofp %c0_i32_4 : i32 to f32
    %17 = vector.broadcast %16 : f32 to vector<1x2x128xf32>
    %18 = tpu.concatenate %17, %15 in 1 : vector<1x2x128xf32>, vector<1x8x128xf32> -> vector<1x10x128xf32>
    %19 = arith.addf %14, %18 : vector<1x10x128xf32>
    %c0_5 = arith.constant 0 : index
    %c0_6 = arith.constant 0 : index
    %c0_7 = arith.constant 0 : index
    %20 = vector.load %arg3[%c0_5, %c0_6, %c0_7] : memref<1x1x128xf32, #tpu.memory_space<vmem>>, vector<1x1x128xf32>
    %21 = vector.broadcast %20 : vector<1x1x128xf32> to vector<1x10x128xf32>
    %22 = arith.addf %19, %21 : vector<1x10x128xf32>
    %cst_8 = arith.constant 0.000000e+00 : f32
    %23 = vector.broadcast %cst_8 : f32 to vector<1x10x128xf32>
    %24 = arith.maximumf %22, %23 : vector<1x10x128xf32>
    %c0_9 = arith.constant 0 : index
    %c0_10 = arith.constant 0 : index
    %c0_11 = arith.constant 0 : index
    %25 = vector.load %arg4[%c0_9, %c0_10, %c0_11] : memref<1x10x128xf32, #tpu.memory_space<vmem>>, vector<1x10x128xf32>
    tpu.vector_store %arg4[%c0_9, %c0_10, %c0_11], %24 {strides = array<i32>} : memref<1x10x128xf32, #tpu.memory_space<vmem>>, vector<1x10x128xf32>,
    return
  }
  func.func @transform_0(%arg0: i32) -> (i32, i32) {
    %c0_i32 = arith.constant 0 : i32
    %c0_i32_0 = arith.constant 0 : i32
    return %arg0, %c0_i32 : i32, i32
  }
  func.func @transform_1(%arg0: i32) -> (i32, i32) {
    %c0_i32 = arith.constant 0 : i32
    %c0_i32_0 = arith.constant 0 : i32
    %c0_i32_1 = arith.constant 0 : i32
    return %c0_i32, %c0_i32_0 : i32, i32
  }
  func.func @transform_2(%arg0: i32) -> (i32, i32, i32) {
    %c0_i32 = arith.constant 0 : i32
    %c0_i32_0 = arith.constant 0 : i32
    %c0_i32_1 = arith.constant 0 : i32
    %c0_i32_2 = arith.constant 0 : i32
    return %c0_i32, %c0_i32_0, %c0_i32_1 : i32, i32, i32
  }
  func.func @transform_3(%arg0: i32) -> (i32, i32, i32) {
    %c0_i32 = arith.constant 0 : i32
    %c0_i32_0 = arith.constant 0 : i32
    %c0_i32_1 = arith.constant 0 : i32
    return %arg0, %c0_i32, %c0_i32_0 : i32, i32, i32
  }
}

</mosaic_0001>

<llo_original>
// kernel: tile.8
$region0: #{tile.8}
  #allocation0 [shape = 's32[1]{0}', space=sflag, size = 0x4, scoped, tag = 'scoped memory for tile.8']
  %s0 = inlined_call_operand.vmem [shape: f32[64], index: 0, kind: input, shape index: {}]
  %s1 = inlined_call_operand.vmem [shape: f32[2,64], index: 1, kind: output, shape index: {}]
  // Predicated region
  $region2: #{tile.8} parent=0 // pred_check
    _
  $region3: #{tile.8} parent=0 // pred_check_branch
    %3 = sbr.rel (0) target = $region5
  $region4: #{tile.8} parent=0 // pred_region
    _
  $region5: #{tile.8} parent=0 // pred_fallthru
    _
  %v4 = vld [vmem:[%s0] ss:$0 sm:$0xff]
  %5 = vst [vmem:[%s1] sm:$0x3] %v4

// kernel: tile.9
$region0: #{tile.9}
  %s0 = inlined_call_operand.vmem [shape: f32[2,64], index: 0, kind: input, shape index: {}]
  %s1 = inlined_call_operand.vmem [shape: f32[1,1,128], index: 1, kind: output, shape index: {}]
  $region1: #{tile.9} parent=0
    #allocation0 [shape = 'u8[4096]{0}', space=vmem, size = 0x1000, scoped, tag = 'scoped mem for output reshape']
    #allocation1 [shape = 'u8[4096]{0}', space=vmem, size = 0x1000, scoped, tag = 'scoped mem for input reshape']
    %s3 = sshll.u32 1, 2
    %s4 = ssub.s32 %s3, 1
    %v5 = vld [vmem:[%s0] sm:%s4]
    %6 = vst [vmem:[#allocation1] sm:%s4] %v5
    %v7 = vld [vmem:[#allocation1] sm:$0x1]
    %vm8 = vcmask 523264
    %9 = vst.msk [vmem:[#allocation0] sm:$0x1] %vm8, %v7
    %s10 = scalar_lea.vmem [#allocation1], 1
    %v11 = vld [vmem:[%s10] sm:$0x1]
    %12 = vrot.lane.b32.xlu0 %v11, 64
    %v13 = vpop.permute.xlu0 %12
    %vm14 = vcmask 1048064
    %15 = vst.msk [vmem:[#allocation0] sm:$0x1] %vm14, %v13
    %s17 = sshll.u32 1, 1
    %s18 = ssub.s32 %s17, 1
    %v20 = vld [vmem:[#allocation0] sm:%s18]
    %s21 = sshll.u32 1, 1
    %s22 = ssub.s32 %s21, 1
    %23 = vst [vmem:[%s1] sm:%s22] %v20

// kernel: deconv1d_pallas.1
$region0: #{deconv1d_pallas.1}
  #allocation0 [shape = 'u32[]', space=smem, size = 0x4, offset = 0x4, fixed_abs, tag = 'smem constant byte address 0x4 - core index']
  #allocation1 [shape = 'u32[144,128]{1,0:T(1,128)}', space=vmem, size = 0x12000, scoped, tag = 'internal scratch']
  %s0 = inlined_call_operand.vmem [shape: bf16[16,4], index: 0, kind: input, shape index: {}]
  %s1 = inlined_call_operand.vmem [shape: bf16[4,384], index: 1, kind: input, shape index: {}]
  %s2 = inlined_call_operand.vmem [shape: f32[1,1,128], index: 2, kind: input, shape index: {}]
  %s3 = inlined_call_operand.vmem [shape: f32[2,10,128], index: 3, kind: output, shape index: {}]
  %s4 = sld [smem:[#allocation0]]
  $region45: #{deconv1d_pallas.1} parent=0
    _
  %s6 = ssub.s32 1, %s4
  %s7 = scalar_select 0, %s6, %s4
  loop: start=0, step=1, limit=4
  $region2: #{deconv1d_pallas.1} parent=0 // loop_pre_header
    _
  $region3: #{deconv1d_pallas.1} parent=0 // loop_header
    %s9 = sphi 0, %s13
    %p10 = scmp.ge.s32.totalorder %s9, 4
    %s19 = sphi 0, %s21
    %s22 = sphi 0, %s19
    %s23 = sphi 0, %s22
    %s39 = sphi 0, %s23
    %s43 = sphi 0, %s43
    %s45 = sphi 0, %s43
    %s46 = sphi 0, %s45
    %s60 = sphi 0, %s46
    %s64 = sphi 0, %s64
    %s66 = sphi 0, %s64
    %s67 = sphi 0, %s66
    %s81 = sphi 0, %s67
    %s87 = sphi 0, %s89
    %s90 = sphi 0, %s87
    %s91 = sphi 0, %s90
    %s107 = sphi 0, %s91
  $region4: #{deconv1d_pallas.1} parent=0 // loop_header_branch
    %12 = sbr.rel (%p10) target = $region8
  $region5: #{deconv1d_pallas.1} parent=0 // loop_body
    %s14 = ssub.s32 %s9, 1
    %s15 = ssub.s32 %s9, 2
    %s16 = sadd.s32 %s9, 1
    %s17 = ssub.s32 %s9, %s16
    %p18 = scmp.eq.s32.totalorder %s17, 0
    %s20 = sadd.s32 %s19, 1
    %s21 = scalar_select %p18, %s19, %s20
    %p24 = pneg %p18
    %p25 = scmp.eq.s32.totalorder %s9, 1
    %p26 = por %p24, %p25
    %p27 = scmp.ne.s32.totalorder %s19, %s22
    %p28 = scmp.eq.s32.totalorder %s9, 0
    %p29 = por %p27, %p28
    %p30 = scmp.ne.s32.totalorder %s19, %s22
    %p31 = scmp.eq.s32.totalorder %s14, 1
    %p32 = por %p30, %p31
    %p33 = scmp.ne.s32.totalorder %s22, %s23
    %p34 = scmp.eq.s32.totalorder %s14, 0
    %p35 = por %p33, %p34
    %p36 = scmp.ne.s32.totalorder %s22, %s23
    %p37 = scmp.eq.s32.totalorder %s15, 1
    %p38 = por %p36, %p37
    %p40 = scmp.ne.s32.totalorder %s23, %s39
    %p41 = scmp.eq.s32.totalorder %s15, 0
    %p42 = por %p40, %p41
    %s44 = sadd.s32 %s43, 1
    %p47 = scmp.eq.s32.totalorder %s9, 1
    %p48 = scmp.ne.s32.totalorder %s43, %s45
    %p49 = scmp.eq.s32.totalorder %s9, 0
    %p50 = por %p48, %p49
    %p51 = scmp.ne.s32.totalorder %s43, %s45
    %p52 = scmp.eq.s32.totalorder %s14, 1
    %p53 = por %p51, %p52
    %p54 = scmp.ne.s32.totalorder %s45, %s46
    %p55 = scmp.eq.s32.totalorder %s14, 0
    %p56 = por %p54, %p55
    %p57 = scmp.ne.s32.totalorder %s45, %s46
    %p58 = scmp.eq.s32.totalorder %s15, 1
    %p59 = por %p57, %p58
    %p61 = scmp.ne.s32.totalorder %s46, %s60
    %p62 = scmp.eq.s32.totalorder %s15, 0
    %p63 = por %p61, %p62
    %s65 = sadd.s32 %s64, 1
    %p68 = scmp.eq.s32.totalorder %s9, 1
    %p69 = scmp.ne.s32.totalorder %s64, %s66
    %p70 = scmp.eq.s32.totalorder %s9, 0
    %p71 = por %p69, %p70
    %p72 = scmp.ne.s32.totalorder %s64, %s66
    %p73 = scmp.eq.s32.totalorder %s14, 1
    %p74 = por %p72, %p73
    %p75 = scmp.ne.s32.totalorder %s66, %s67
    %p76 = scmp.eq.s32.totalorder %s14, 0
    %p77 = por %p75, %p76
    %p78 = scmp.ne.s32.totalorder %s66, %s67
    %p79 = scmp.eq.s32.totalorder %s15, 1
    %p80 = por %p78, %p79
    %p82 = scmp.ne.s32.totalorder %s67, %s81
    %p83 = scmp.eq.s32.totalorder %s15, 0
    %p84 = por %p82, %p83
    %s85 = ssub.s32 %s9, %s16
    %p86 = scmp.eq.s32.totalorder %s85, 0
    %s88 = sadd.s32 %s87, 1
    %s89 = scalar_select %p86, %s87, %s88
    %p92 = pneg %p86
    %p93 = scmp.eq.s32.totalorder %s9, 1
    %p94 = por %p92, %p93
    %p95 = scmp.ne.s32.totalorder %s87, %s90
    %p96 = scmp.eq.s32.totalorder %s9, 0
    %p97 = por %p95, %p96
    %p98 = scmp.ne.s32.totalorder %s87, %s90
    %p99 = scmp.eq.s32.totalorder %s14, 1
    %p100 = por %p98, %p99
    %p101 = scmp.ne.s32.totalorder %s90, %s91
    %p102 = scmp.eq.s32.totalorder %s14, 0
    %p103 = por %p101, %p102
    %p104 = scmp.ne.s32.totalorder %s90, %s91
    %p105 = scmp.eq.s32.totalorder %s15, 1
    %p106 = por %p104, %p105
    %p108 = scmp.ne.s32.totalorder %s91, %s107
    %p109 = scmp.eq.s32.totalorder %s15, 0
    %p110 = por %p108, %p109
    %p111 = scmp.le.s32.totalorder 1, %s9
    %p112 = scmp.lt.s32.totalorder %s9, 3
    %p113 = pnand %p111, %p112
    %p114 = pneg %p113
    // Predicated region
    $region9: #{deconv1d_pallas.1} parent=5 // pred_check
      _
    $region10: #{deconv1d_pallas.1} parent=5 // pred_check_branch
      %116 = sbr.rel (%p113) target = $region12
    $region11: #{deconv1d_pallas.1} parent=5 // pred_region
      %s117 = ssub.s32 %s9, 1
      // Predicated region
      $region13: #{deconv1d_pallas.1} parent=11 // pred_check
        %p118 = pneg %p56
      $region14: #{deconv1d_pallas.1} parent=11 // pred_check_branch
        %120 = sbr.rel (%p118) target = $region16
      $region15: #{deconv1d_pallas.1} parent=11 // pred_region
        _
      $region16: #{deconv1d_pallas.1} parent=11 // pred_fallthru
        _
      // Predicated region
      $region17: #{deconv1d_pallas.1} parent=11 // pred_check
        %p121 = pneg %p77
      $region18: #{deconv1d_pallas.1} parent=11 // pred_check_branch
        %123 = sbr.rel (%p121) target = $region20
      $region19: #{deconv1d_pallas.1} parent=11 // pred_region
        _
      $region20: #{deconv1d_pallas.1} parent=11 // pred_fallthru
        _
    $region12: #{deconv1d_pallas.1} parent=5 // pred_fallthru
      _
    %p124 = scmp.lt.s32.totalorder %s9, 2
    // Predicated region
    $region21: #{deconv1d_pallas.1} parent=5 // pred_check
      %p125 = pneg %p124
    $region22: #{deconv1d_pallas.1} parent=5 // pred_check_branch
      %127 = sbr.rel (%p125) target = $region24
    $region23: #{deconv1d_pallas.1} parent=5 // pred_region
      // Predicated region
      $region25: #{deconv1d_pallas.1} parent=23 // pred_check
        %p128 = pneg %p29
      $region26: #{deconv1d_pallas.1} parent=23 // pred_check_branch
        %130 = sbr.rel (%p128) target = $region28
      $region27: #{deconv1d_pallas.1} parent=23 // pred_region
        %p131 = scmp.lt.s32.totalorder %s9, 1
        %s132 = scalar_select %p131, %s9, 1
        %s133 = smul.addr %s132, 4
        %s134 = scalar_lea.vmem %s0, %s133
      $region28: #{deconv1d_pallas.1} parent=23 // pred_fallthru
        _
    $region24: #{deconv1d_pallas.1} parent=5 // pred_fallthru
      _
    %p135 = scmp.le.s32.totalorder 1, %s9
    %p136 = scmp.lt.s32.totalorder %s9, 3
    %p137 = pnand %p135, %p136
    %p138 = pneg %p137
    // Predicated region
    $region29: #{deconv1d_pallas.1} parent=5 // pred_check
      _
    $region30: #{deconv1d_pallas.1} parent=5 // pred_check_branch
      %140 = sbr.rel (%p137) target = $region32
    $region31: #{deconv1d_pallas.1} parent=5 // pred_region
      %s141 = ssub.s32 %s9, 1
      %p142 = scmp.lt.s32.totalorder %s14, 1
      %s143 = scalar_select %p142, %s14, 1
      %s144 = smul.addr %s143, 4
      %s145 = scalar_lea.vmem %s0, %s144
      %p146 = pneg %p35
      %p147 = pneg %p32
      %p148 = pneg %p56
      %p149 = pneg %p53
      %p150 = pneg %p77
      %p151 = pneg %p74
      %p152 = pneg %p103
      %p153 = pneg %p100
      %p154 = scmp.lt.s32.totalorder %s14, 1
      %s155 = scalar_select %p154, %s14, 1
      %s156 = smul.addr %s155, 2
      %s157 = smul.addr %s156, 8
      %s158 = scalar_lea.vmem %s3, %s157
      %p159 = scmp.lt.s32.totalorder %s14, 1
      %s160 = scalar_select %p159, %s14, 1
      %s161 = smul.addr %s160, 4
      %s162 = scalar_lea.vmem %s0, %s161
      %p163 = scmp.lt.s32.totalorder %s14, 1
      %s164 = scalar_select %p163, %s14, 1
      %s165 = smul.addr %s164, 2
      %s166 = smul.addr %s165, 8
      %s167 = scalar_lea.vmem %s3, %s166
      %v169 = vld [vmem:[%s162] sm:$0xf]
      %v170 = vld [vmem:[%s1] sm:$0x3f]
      %v172 = vcombine.high %v170, %v170
      %v174 = vunpack.c.l.s4 1983009808
      %v175 = vunpack.c.0.s8 %v174
      %v176 = vlaneseq
      %v177 = vshrl.u32 %v176, 7
      %v178 = vsub.s32 %v175, %v177
      %v179 = vrot.slane %v170, %v178
      %v181 = vunpack.c.l.s4 1983009808
      %v182 = vunpack.c.0.s8 %v181
      %v183 = vlaneseq
      %v184 = vshrl.u32 %v183, 7
      %v185 = vsub.s32 %v182, %v184
      %v186 = vrot.slane %v172, %v185
      %v187 = vcombine.high %v179, %v179
      %vm188 = vcmask 31744
      %v190 = vsel %vm188, %v169, 0
      %vm192 = vcmask 1041408
      %v194 = vsel %vm192, %v179, 0
      %v197 = vsel %vm192, %v187, 0
      %v200 = vsel %vm192, %v186, 0
      %202 = vmatprep.subr.bf16.mxu0 0
      %203 = vmatpush1.bf16.msra.mxu0 0
      %204 = vmatprep.subr.bf16.mxu0 0
      %205 = vmatpush1.bf16.msra.mxu0 0
      %206 = vmatprep.subr.bf16.mxu0 0
      %207 = vmatpush1.bf16.msra.mxu0 0
      %208 = vmatprep.subr.bf16.mxu0 0
      %209 = vmatpush1.bf16.msra.mxu0 0
      %210 = vmatprep.subr.bf16.mxu0 0
      %211 = vmatpush1.bf16.msra.mxu0 0
      %212 = vmatprep.subr.bf16.mxu0 0
      %213 = vmatpush1.bf16.msra.mxu0 0
      %214 = vmatprep.subr.bf16.mxu0 0
      %215 = vmatpush1.bf16.msra.mxu0 0
      %216 = vmatprep.subr.bf16.mxu0 %v197
      %217 = vmatpush1.bf16.msra.mxu0 %v194
      %218 = vmatprep.subr.bf16.mxu0 0
      %219 = vmatpush2.bf16.msra.mxu0 0
      %220 = vmatprep.subr.bf16.mxu0 0
      %221 = vmatpush2.bf16.msra.mxu0 0
      %222 = vmatprep.subr.bf16.mxu0 0
      %223 = vmatpush2.bf16.msra.mxu0 0
      %224 = vmatprep.subr.bf16.mxu0 0
      %225 = vmatpush2.bf16.msra.mxu0 0
      %226 = vmatprep.subr.bf16.mxu0 0
      %227 = vmatpush2.bf16.msra.mxu0 0
      %228 = vmatprep.subr.bf16.mxu0 0
      %229 = vmatpush2.bf16.msra.mxu0 0
      %230 = vmatprep.subr.bf16.mxu0 0
      %231 = vmatpush2.bf16.msra.mxu0 0
      %232 = vmatprep.subr.bf16.mxu0 0
      %233 = vmatpush2.bf16.msra.mxu0 0
      %234 = vmatprep.mubr.bf16.mxu0 0
      %235 = vmatmul.mubr.bf16.gmra.mxu0 %v190
      %v236 = vpop.f32.mrf.mxu0
      %v237 = vadd.f32 0.0, %v236
      %v238 = vpop.f32.mrf.mxu0
      %v239 = vadd.f32 0.0, %v238
      %v240 = vpop.f32.mrf.mxu0
      %v241 = vpop.f32.mrf.mxu0
      %242 = vdwg.mxu0
      %243 = vmatprep.subr.bf16.mxu0 0
      %244 = vmatpush1.bf16.msra.mxu0 0
      %245 = vmatprep.subr.bf16.mxu0 0
      %246 = vmatpush1.bf16.msra.mxu0 0
      %247 = vmatprep.subr.bf16.mxu0 0
      %248 = vmatpush1.bf16.msra.mxu0 0
      %249 = vmatprep.subr.bf16.mxu0 0
      %250 = vmatpush1.bf16.msra.mxu0 0
      %251 = vmatprep.subr.bf16.mxu0 0
      %252 = vmatpush1.bf16.msra.mxu0 0
      %253 = vmatprep.subr.bf16.mxu0 0
      %254 = vmatpush1.bf16.msra.mxu0 0
      %255 = vmatprep.subr.bf16.mxu0 0
      %256 = vmatpush1.bf16.msra.mxu0 0
      %257 = vmatprep.subr.bf16.mxu0 0
      %258 = vmatpush1.bf16.msra.mxu0 %v200
      %259 = vmatprep.subr.bf16.mxu0 0
      %260 = vmatpush2.bf16.msra.mxu0 0
      %261 = vmatprep.subr.bf16.mxu0 0
      %262 = vmatpush2.bf16.msra.mxu0 0
      %263 = vmatprep.subr.bf16.mxu0 0
      %264 = vmatpush2.bf16.msra.mxu0 0
      %265 = vmatprep.subr.bf16.mxu0 0
      %266 = vmatpush2.bf16.msra.mxu0 0
      %267 = vmatprep.subr.bf16.mxu0 0
      %268 = vmatpush2.bf16.msra.mxu0 0
      %269 = vmatprep.subr.bf16.mxu0 0
      %270 = vmatpush2.bf16.msra.mxu0 0
      %271 = vmatprep.subr.bf16.mxu0 0
      %272 = vmatpush2.bf16.msra.mxu0 0
      %273 = vmatprep.subr.bf16.mxu0 0
      %274 = vmatpush2.bf16.msra.mxu0 0
      %275 = vmatprep.mubr.bf16.mxu0 0
      %276 = vmatmul.mubr.bf16.gmra.mxu0 %v190
      %v277 = vpop.f32.mrf.mxu0
      %v278 = vadd.f32 0.0, %v277
      %v279 = vpop.f32.mrf.mxu0
      %v280 = vpop.f32.mrf.mxu0
      %v281 = vpop.f32.mrf.mxu0
      %282 = vdwg.mxu0
      %v284 = vrot.slane %v239, 7
      %vm286 = vcmask 1040384
      %v287 = vsel %vm286, 0.0, %v284
      %v288 = vsel %vm286, %v284, 0.0
      %v289 = vadd.f32 %v237, %v287
      %v290 = vadd.f32 %v288, 0.0
      %v292 = vrot.slane %v278, 6
      %v294 = vsel %vm192, 0.0, %v292
      %v295 = vadd.f32 %v289, %v294
      %v296 = vadd.f32 %v290, %v292
      %v297 = vld [vmem:[%s2] sm:$0x1]
      %v299 = vlaneseq
      %v300 = vshrl.u32 %v299, 7
      %v301 = vsub.s32 0, %v300
      %v302 = vrot.slane %v297, %v301
      %v304 = vadd.f32 %v295, %v302
      %v305 = vadd.f32 %v296, %v302
      %v306 = vmax.f32 %v304, 0.0
      %v307 = vmax.f32 %v305, 0.0
      %308 = vst [vmem:[%s167] sm:$0xff] %v306
      %309 = vst [vmem:[%s167 + $0x8] sm:$0x3] %v307
      %p310 = scmp.lt.s32.totalorder %s14, 1
      %s311 = scalar_select %p310, %s14, 1
      %s312 = smul.addr %s311, 2
      %s313 = smul.addr %s312, 8
      %s314 = scalar_lea.vmem %s3, %s313
      // Predicated region
      $region33: #{deconv1d_pallas.1} parent=31 // pred_check
        %p315 = pneg %p100
      $region34: #{deconv1d_pallas.1} parent=31 // pred_check_branch
        %317 = sbr.rel (%p315) target = $region36
      $region35: #{deconv1d_pallas.1} parent=31 // pred_region
        _
      $region36: #{deconv1d_pallas.1} parent=31 // pred_fallthru
        _
    $region32: #{deconv1d_pallas.1} parent=5 // pred_fallthru
      _
    %p318 = scmp.le.s32.totalorder 2, %s9
    // Predicated region
    $region37: #{deconv1d_pallas.1} parent=5 // pred_check
      %p319 = pneg %p318
    $region38: #{deconv1d_pallas.1} parent=5 // pred_check_branch
      %321 = sbr.rel (%p319) target = $region40
    $region39: #{deconv1d_pallas.1} parent=5 // pred_region
      %s322 = ssub.s32 %s9, 2
      // Predicated region
      $region41: #{deconv1d_pallas.1} parent=39 // pred_check
        %p323 = pneg %p106
      $region42: #{deconv1d_pallas.1} parent=39 // pred_check_branch
        %325 = sbr.rel (%p323) target = $region44
      $region43: #{deconv1d_pallas.1} parent=39 // pred_region
        %p326 = scmp.lt.s32.totalorder %s15, 1
        %s327 = scalar_select %p326, %s15, 1
        %s328 = smul.addr %s327, 2
        %s329 = smul.addr %s328, 8
        %s330 = scalar_lea.vmem %s3, %s329
      $region44: #{deconv1d_pallas.1} parent=39 // pred_fallthru
        _
    $region40: #{deconv1d_pallas.1} parent=5 // pred_fallthru
      _
  $region6: #{deconv1d_pallas.1} parent=0 // loop_footer
    %s13 = sadd.s32 1, %s9
  $region7: #{deconv1d_pallas.1} parent=0 // loop_footer_branch
    %8 = sbr.rel target = $region3
  $region8: #{deconv1d_pallas.1} parent=0 // loop_exit
    _

</llo_original>
